<compile_context>
chip_gen: v7x
topology: tpu7x:2x2x1
jax: 0.10.0
libtpu: 0.0.40
codegen_flags: <defaults>
</compile_context>

<pallas_src>
import functools

import jax
import jax.numpy as jnp
from jax.experimental import pallas as pl
from jax.experimental.pallas import tpu as pltpu


def _round_up(x: int, m: int) -> int:
    return ((x + m - 1) // m) * m


# ---------------------------------------------------------------------------
# Kernels
# ---------------------------------------------------------------------------
def _linear_tiled_kernel(x_ref, wt_ref, b_ref, o_ref):
    # x_ref: (tm, tk), wt_ref: (tk, tn), b_ref: (1, tn), o_ref: (tm, tn) f32.
    # The output block is resident across the K grid axis (index_map ignores
    # k), so accumulate directly into o_ref -> no extra VMEM scratch.
    k = pl.program_id(2)

    @pl.when(k == 0)
    def _init():
        # Seed the accumulator with the bias (added exactly once).
        o_ref[...] = jnp.broadcast_to(b_ref[...], o_ref.shape)

    o_ref[...] += jnp.dot(
        x_ref[...], wt_ref[...], preferred_element_type=jnp.float32
    )


def _linear_small_kernel(x_ref, wt_ref, b_ref, o_ref):
    # Whole problem in one VMEM block: single matmul + bias, no padding.
    o_ref[...] = (
        jnp.dot(x_ref[...], wt_ref[...], preferred_element_type=jnp.float32)
        + b_ref[...]
    )


# ---------------------------------------------------------------------------
# Chip-aware configuration (queried once, outside jit)
# ---------------------------------------------------------------------------
def _chip_config():
    try:
        vmem_bytes = pltpu.get_tpu_info().vmem_capacity_bytes
    except Exception:
        vmem_bytes = None
    if vmem_bytes is not None and vmem_bytes >= 96 * (1 << 20):
        # v5e / v6e: 128 MiB physical VMEM, lower HBM BW -> big tiles.
        # Double-buffered footprint ~28 MiB, well under the 64 MiB budget.
        return 512, 1024, 2048, 64 * (1 << 20)
    # v7x (64 MiB VMEM) or unknown chip: smaller tiles, tighter budget.
    # Double-buffered footprint ~10 MiB.
    return 512, 512, 1024, 44 * (1 << 20)


# ---------------------------------------------------------------------------
# Forward
# ---------------------------------------------------------------------------
@functools.partial(jax.jit, static_argnames=("tm", "tn", "tk", "vmem_limit"))
def _linear_forward_impl(x, w_t, bias, *, tm, tn, tk, vmem_limit):
    B, In = x.shape
    In_w, Out = w_t.shape
    assert In == In_w, "weight / input feature mismatch"
    b2 = bias.reshape(1, Out)

    cost = pl.CostEstimate(
        flops=2 * B * In * Out,
        transcendentals=0,
        bytes_accessed=4 * (B * In + In * Out + B * Out),
    )

    # ---- Degenerate small-shape path: one full-array block, no padding. ----
    if B * In + In * Out + B * Out <= (1 << 20):  # <= 4 MiB of f32 total
        return pl.pallas_call(
            _linear_small_kernel,
            out_shape=jax.ShapeDtypeStruct((B, Out), jnp.float32),
            cost_estimate=cost,
        )(x, w_t, b2)

    # ---- Tiled (M, N, K) path ----
    tm_eff = min(tm, _round_up(B, 8))       # sublane-aligned
    tk_eff = min(tk, _round_up(In, 128))    # lane-aligned contraction tile
    tn_eff = min(tn, _round_up(Out, 128))   # lane-dense output tile

    Mp = _round_up(B, tm_eff)
    Np_full = _round_up(Out, 128)
    # v7x has 2 TensorCores: if the M grid collapses to 1, make sure the N
    # grid has at least 2 steps so both cores get work (no-op on v5e/v6e).
    if Mp // tm_eff == 1 and Np_full >= 256 and Np_full // tn_eff < 2:
        tn_eff = max(128, ((Np_full // 2) // 128) * 128)

    Kp = _round_up(In, tk_eff)
    Np = _round_up(Out, tn_eff)

    # Pad only when actually unaligned (K-padding zeros contribute nothing).
    x_p = x if (Mp == B and Kp == In) else jnp.pad(
        x, ((0, Mp - B), (0, Kp - In)))
    wt_p = w_t if (Kp == In and Np == Out) else jnp.pad(
        w_t, ((0, Kp - In), (0, Np - Out)))
    b_p = b2 if Np == Out else jnp.pad(b2, ((0, 0), (0, Np - Out)))

    grid = (Mp // tm_eff, Np // tn_eff, Kp // tk_eff)

    out_p = pl.pallas_call(
        _linear_tiled_kernel,
        out_shape=jax.ShapeDtypeStruct((Mp, Np), jnp.float32),
        grid_spec=pltpu.PrefetchScalarGridSpec(
            num_scalar_prefetch=0,
            grid=grid,
            in_specs=[
                pl.BlockSpec((tm_eff, tk_eff), lambda i, j, k: (i, k)),  # x
                pl.BlockSpec((tk_eff, tn_eff), lambda i, j, k: (k, j)),  # W.T
                pl.BlockSpec((1, tn_eff), lambda i, j, k: (0, j)),       # bias
            ],
            out_specs=pl.BlockSpec((tm_eff, tn_eff), lambda i, j, k: (i, j)),
        ),
        compiler_params=pltpu.CompilerParams(
            # M/N parallel (shards across v7x's 2 TCs), K is the reduction.
            dimension_semantics=("parallel", "parallel", "arbitrary"),
            vmem_limit_bytes=vmem_limit,
        ),
        cost_estimate=cost,
    )(x_p, wt_p, b_p)

    if Mp == B and Np == Out:
        return out_p
    return out_p[:B, :Out]


def prepare_linear_weight(weight):
    """One-time param prep: transpose the (Out, In) weight to (In, Out)."""
    return jnp.asarray(weight).T


def linear_forward(x, weight_t, bias):
    """y = x @ W.T + b, with the weight stored pre-transposed (In, Out)."""
    tm, tn, tk, vmem_limit = _chip_config()
    return _linear_forward_impl(
        x, weight_t, bias, tm=tm, tn=tn, tk=tk, vmem_limit=vmem_limit)


if __name__ == "__main__":
    key = jax.random.PRNGKey(0)
    k_x, k_w, k_b, k_rest = jax.random.split(key, 4)

    batch, input_features, output_features = 8, 32, 16

    # Deterministic parameter init mirroring weight.data.uniform_(-0.1, 0.1)
    x = jax.random.normal(k_x, (batch, input_features), dtype=jnp.float32)
    weight = jax.random.uniform(
        k_w, (output_features, input_features), dtype=jnp.float32,
        minval=-0.1, maxval=0.1)
    bias = jax.random.uniform(
        k_b, (output_features,), dtype=jnp.float32, minval=-0.1, maxval=0.1)

    # Pre-transpose once, outside the hot path (mirrors param init).
    weight_t = prepare_linear_weight(weight)

    y = jax.block_until_ready(linear_forward(x, weight_t, bias))
    y_ref = x @ weight.T + bias[None, :]
    assert y.shape == (batch, output_features)
    assert jnp.allclose(y, y_ref, atol=1e-5, rtol=1e-5), "mismatch vs reference"

    # Larger, multi-tile shape to exercise the tiled (M, N, K) grid path.
    kx2, kw2, kb2 = jax.random.split(k_rest, 3)
    B2, In2, Out2 = 512, 2048, 1024
    x2 = jax.random.normal(kx2, (B2, In2), dtype=jnp.float32)
    w2 = jax.random.uniform(kw2, (Out2, In2), dtype=jnp.float32,
                            minval=-0.1, maxval=0.1)
    b2 = jax.random.uniform(kb2, (Out2,), dtype=jnp.float32,
                            minval=-0.1, maxval=0.1)
    w2_t = prepare_linear_weight(w2)
    y2 = jax.block_until_ready(linear_forward(x2, w2_t, b2))
    y2_ref = x2 @ w2.T + b2[None, :]
    assert jnp.allclose(y2, y2_ref, atol=1e-3, rtol=1e-4), \
        "mismatch (tiled) vs reference"

    print("KERNEL_OK")
</pallas_src>

<mosaic_0001>
module attributes {stable_mosaic.version = 11 : i64} {
  func.func @_linear_small_kernel(%arg0: memref<8x32xf32, #tpu.memory_space<vmem>>, %arg1: memref<32x16xf32, #tpu.memory_space<vmem>>, %arg2: memref<1x16xf32, #tpu.memory_space<vmem>>, %arg3: memref<8x16xf32, #tpu.memory_space<vmem>>) attributes {dimension_semantics = [], scalar_prefetch = 0 : i64, scratch_operands = 0 : i64, tpu.core_type = #tpu.core_type<tc>} {
    %c0 = arith.constant 0 : index
    %c0_0 = arith.constant 0 : index
    %0 = vector.load %arg0[%c0, %c0_0] : memref<8x32xf32, #tpu.memory_space<vmem>>, vector<8x32xf32>
    %c0_1 = arith.constant 0 : index
    %c0_2 = arith.constant 0 : index
    %1 = vector.load %arg1[%c0_1, %c0_2] : memref<32x16xf32, #tpu.memory_space<vmem>>, vector<32x16xf32>
    %cst = arith.constant dense<0.000000e+00> : vector<8x16xf32>
    %2 = tpu.matmul %0, %1, %cst {dimension_numbers = #tpu.dot_dimension_numbers<[1], [0], [0], [1], [0, 0, 1, 1], [], []>} : vector<8x32xf32>, vector<32x16xf32>, vector<8x16xf32> -> vector<8x16xf32>
    %c0_3 = arith.constant 0 : index
    %c0_4 = arith.constant 0 : index
    %3 = vector.load %arg2[%c0_3, %c0_4] : memref<1x16xf32, #tpu.memory_space<vmem>>, vector<1x16xf32>
    %4 = vector.broadcast %3 : vector<1x16xf32> to vector<8x16xf32>
    %5 = arith.addf %2, %4 : vector<8x16xf32>
    %c0_5 = arith.constant 0 : index
    %c0_6 = arith.constant 0 : index
    %6 = vector.load %arg3[%c0_5, %c0_6] : memref<8x16xf32, #tpu.memory_space<vmem>>, vector<8x16xf32>
    tpu.vector_store %arg3[%c0_5, %c0_6], %5 {strides = array<i32>} : memref<8x16xf32, #tpu.memory_space<vmem>>, vector<8x16xf32>,
    return
  }
}

</mosaic_0001>

<llo_original>
// kernel: _linear_forward_impl.1
$region0: #{_linear_forward_impl.1}
  #allocation0 [shape = 'u32[]', space=smem, size = 0x4, offset = 0x4, fixed_abs, tag = 'smem constant byte address 0x4 - core index']
  #allocation1 [shape = 'u32[144,128]{1,0:T(1,128)}', space=vmem, size = 0x12000, scoped, tag = 'internal scratch']
  %s0 = inlined_call_operand.vmem [shape: f32[8,32], index: 0, kind: input, shape index: {}]
  %s1 = inlined_call_operand.vmem [shape: f32[32,16], index: 1, kind: input, shape index: {}]
  %s2 = inlined_call_operand.vmem [shape: f32[1,16], index: 2, kind: input, shape index: {}]
  %s3 = inlined_call_operand.hbm [shape: f32[8,16], index: 3, kind: output, shape index: {}]
  %s4 = sld [smem:[#allocation0]]
  $region22: #{_linear_forward_impl.1} parent=0
    _
  %s6 = ssub.s32 1, %s4
  %s7 = scalar_select 0, %s6, %s4
  $region1: #{_linear_forward_impl.1} parent=0
    #allocation2 [shape = 'u8[4096]{0}', space=vmem, size = 0x1000, scoped, tag = 'output window, operand 0, single buffered']
    #allocation3 [shape = 's32[1]{0}', space=sflag, size = 0x4, scoped, tag = 'scoped memory for _linear_forward_impl.1']
    %8 = vsyncpa [#allocation3], 0
    // Predicated region
    $region2: #{_linear_forward_impl.1} parent=1 // pred_check
      _
    $region3: #{_linear_forward_impl.1} parent=1 // pred_check_branch
      %10 = sbr.rel (0) target = $region5
    $region4: #{_linear_forward_impl.1} parent=1 // pred_region
      _
    $region5: #{_linear_forward_impl.1} parent=1 // pred_fallthru
      _
    // Predicated region
    $region6: #{_linear_forward_impl.1} parent=1 // pred_check
      _
    $region7: #{_linear_forward_impl.1} parent=1 // pred_check_branch
      %12 = sbr.rel (0) target = $region9
    $region8: #{_linear_forward_impl.1} parent=1 // pred_region
      _
    $region9: #{_linear_forward_impl.1} parent=1 // pred_fallthru
      _
    // Predicated region
    $region10: #{_linear_forward_impl.1} parent=1 // pred_check
      _
    $region11: #{_linear_forward_impl.1} parent=1 // pred_check_branch
      %14 = sbr.rel (0) target = $region13
    $region12: #{_linear_forward_impl.1} parent=1 // pred_region
      _
    $region13: #{_linear_forward_impl.1} parent=1 // pred_fallthru
      _
    %v15 = vld [vmem:[%s0] sm:$0xff]
    %v16 = vld [vmem:[%s1] sm:$0xff]
    %v17 = vld [vmem:[%s1 + $0x8] sm:$0xff]
    %v18 = vld [vmem:[%s1 + $0x10] sm:$0xff]
    %v19 = vld [vmem:[%s1 + $0x18] sm:$0xff]
    %v20 = vld [vmem:[%s2] sm:$0x1]
    %v22 = vlaneseq
    %v23 = vshrl.u32 %v22, 7
    %v24 = vsub.s32 0, %v23
    %v25 = vrot.slane %v20, %v24
    %vm27 = vcmask 261120
    %v29 = vsel %vm27, %v15, 0
    %31 = vmatprep.subr.mxu0 0.0
    %32 = vmatpush1.msra.mxu0 %v16
    %33 = vmatprep.subr.mxu0 0.0
    %34 = vmatpush1.msra.mxu0 %v17
    %35 = vmatprep.subr.mxu0 0.0
    %36 = vmatpush1.msra.mxu0 %v18
    %37 = vmatprep.subr.mxu0 0.0
    %38 = vmatpush1.msra.mxu0 %v19
    %39 = vmatprep.subr.mxu0 0.0
    %40 = vmatpush1.msra.mxu0 0.0
    %41 = vmatprep.subr.mxu0 0.0
    %42 = vmatpush1.msra.mxu0 0.0
    %43 = vmatprep.subr.mxu0 0.0
    %44 = vmatpush1.msra.mxu0 0.0
    %45 = vmatprep.subr.mxu0 0.0
    %46 = vmatpush1.msra.mxu0 0.0
    %47 = vmatprep.subr.mxu0 0.0
    %48 = vmatpush1.msra.mxu0 0.0
    %49 = vmatprep.subr.mxu0 0.0
    %50 = vmatpush1.msra.mxu0 0.0
    %51 = vmatprep.subr.mxu0 0.0
    %52 = vmatpush1.msra.mxu0 0.0
    %53 = vmatprep.subr.mxu0 0.0
    %54 = vmatpush1.msra.mxu0 0.0
    %55 = vmatprep.subr.mxu0 0.0
    %56 = vmatpush1.msra.mxu0 0.0
    %57 = vmatprep.subr.mxu0 0.0
    %58 = vmatpush1.msra.mxu0 0.0
    %59 = vmatprep.subr.mxu0 0.0
    %60 = vmatpush1.msra.mxu0 0.0
    %61 = vmatprep.subr.mxu0 0.0
    %62 = vmatpush1.msra.mxu0 0.0
    %63 = vmatprep.subr.mxu0 0.0
    %64 = vmatpush1.msra.mxu0 0.0
    %65 = vmatprep.subr.mxu0 0.0
    %66 = vmatpush1.msra.mxu0 0.0
    %67 = vmatprep.subr.mxu0 0.0
    %68 = vmatpush1.msra.mxu0 0.0
    %69 = vmatprep.subr.mxu0 0.0
    %70 = vmatpush1.msra.mxu0 0.0
    %71 = vmatprep.subr.mxu0 0.0
    %72 = vmatpush1.msra.mxu0 0.0
    %73 = vmatprep.subr.mxu0 0.0
    %74 = vmatpush1.msra.mxu0 0.0
    %75 = vmatprep.subr.mxu0 0.0
    %76 = vmatpush1.msra.mxu0 0.0
    %77 = vmatprep.subr.mxu0 0.0
    %78 = vmatpush1.msra.mxu0 0.0
    %79 = vmatprep.subr.mxu0 0.0
    %80 = vmatpush1.msra.mxu0 0.0
    %81 = vmatprep.subr.mxu0 0.0
    %82 = vmatpush1.msra.mxu0 0.0
    %83 = vmatprep.subr.mxu0 0.0
    %84 = vmatpush1.msra.mxu0 0.0
    %85 = vmatprep.subr.mxu0 0.0
    %86 = vmatpush1.msra.mxu0 0.0
    %87 = vmatprep.subr.mxu0 0.0
    %88 = vmatpush1.msra.mxu0 0.0
    %89 = vmatprep.subr.mxu0 0.0
    %90 = vmatpush1.msra.mxu0 0.0
    %91 = vmatprep.subr.mxu0 0.0
    %92 = vmatpush1.msra.mxu0 0.0
    %93 = vmatprep.subr.mxu0 0.0
    %94 = vmatpush1.msra.mxu0 0.0
    %95 = vmatprep.mubr.f32.mxu0 0.0
    %96 = vmatmul.mubr.f32.gmra.mrb[0].mxu0 %v29
    %v97 = vpop.f32.mrb[0].mxu0
    %v98 = vadd.f32 %v25, %v97
    %v99 = vpop.f32.mrb[0].mxu0
    %100 = vdwg.mxu0
    %vm101 = vcmask 130048
    %102 = vst.msk [vmem:[#allocation2] sm:$0xff] %vm101, %v98
    // Predicated region
    $region14: #{_linear_forward_impl.1} parent=1 // pred_check
      _
    $region15: #{_linear_forward_impl.1} parent=1 // pred_check_branch
      %104 = sbr.rel (0) target = $region17
    $region16: #{_linear_forward_impl.1} parent=1 // pred_region
      %s106 = ssub.s32 128, 128
      %107 = vsyncadd [#allocation3], %s106
      %s109 = sshll.u32 [#allocation2], 4
      %s110 = int_to_ptr.vmem [resolvable:$true] %s109
      %112 = dma.vmem_to_hbm [thread:$0]  %s110, 128, %s3, [#allocation3]
    $region17: #{_linear_forward_impl.1} parent=1 // pred_fallthru
      _
    // Predicated region
    $region18: #{_linear_forward_impl.1} parent=1 // pred_check
      _
    $region19: #{_linear_forward_impl.1} parent=1 // pred_check_branch
      %114 = sbr.rel (0) target = $region21
    $region20: #{_linear_forward_impl.1} parent=1 // pred_region
      %115 = dma.done [#allocation3], 128
    $region21: #{_linear_forward_impl.1} parent=1 // pred_fallthru
      _
    %116 = vsyncpa [#allocation3], 1

</llo_original>
